<compile_context>
chip_gen: v7x
topology: tpu7x:2x2x1
jax: 0.10.0
libtpu: 0.0.40
codegen_flags: <defaults>
</compile_context>

<pallas_src>
import jax
import jax.numpy as jnp
from jax.experimental import pallas as pl
from jax.experimental.pallas import tpu as pltpu


_MIN_SUBLANE = {4: 8, 2: 16, 1: 32}


def _cdiv(a, b):
    return -(-a // b)


def _round_up(a, m):
    return _cdiv(a, m) * m


# ----------------------------------------------------------------------------
# Kernels
# ----------------------------------------------------------------------------
def _rope_kernel_3d(x_ref, tab_ref, o_ref):
    # x_ref / o_ref: (tT, H, D)   (batch squeezed by the BlockSpec)
    # tab_ref: (tT, 2*D) f32, lanes = [cos|cos | sin|-sin]
    x = x_ref[...]
    dim = x.shape[-1]
    half = dim // 2
    # rotate_half per head: [x2 | x1]  (XLU lane rotate, keeps VPU full-width)
    x_rot = pltpu.roll(x, shift=half, axis=2)
    tab = tab_ref[...]
    cos = tab[:, None, :dim]          # (tT, 1, D) broadcast over heads
    sin = tab[:, None, dim:]
    y = x.astype(jnp.float32) * cos + x_rot.astype(jnp.float32) * sin
    o_ref[...] = y.astype(o_ref.dtype)


def _rope_kernel_2d(x_ref, tab_ref, o_ref):
    # x_ref / o_ref: (R, D) with rows = flattened (time, head)
    # tab_ref: (R, 2*D) f32 (per-row table, already repeated across heads)
    x = x_ref[...]
    dim = x.shape[-1]
    half = dim // 2
    x_rot = pltpu.roll(x, shift=half, axis=1)
    tab = tab_ref[...]
    cos = tab[:, :dim]
    sin = tab[:, dim:]
    y = x.astype(jnp.float32) * cos + x_rot.astype(jnp.float32) * sin
    o_ref[...] = y.astype(o_ref.dtype)


# ----------------------------------------------------------------------------
# Sizing helpers
# ----------------------------------------------------------------------------
def _vmem_limit_bytes():
    cap = 128 * 1024 * 1024
    try:
        cap = int(pltpu.get_tpu_info().vmem_capacity_bytes)
    except Exception:
        pass
    # Leave headroom for Mosaic internal scratch; never exceed 64 MiB scoped
    # VMEM (v7x only has 64 MiB per TensorCore; v5e/v6e have 128 MiB).
    return min(64 * 1024 * 1024, (cap * 3) // 4)


def _pick_seq_tile(T, B, x_bytes_per_t, tab_bytes_per_t, sub_mult, vmem_limit):
    """Largest sequence tile whose double-buffered live set (2x in + 2x out +
    2x table blocks) fits comfortably inside the scoped VMEM limit, with a
    ~8 MiB cap per x-block (diminishing HBM-roofline returns past that)."""
    budget = int(vmem_limit * 0.70)
    per_t = 4 * x_bytes_per_t + 2 * tab_bytes_per_t
    tT = max(1, budget // per_t)
    tT = min(tT, max(1, (8 * 1024 * 1024) // max(1, x_bytes_per_t)))
    tT = min(tT, T)
    if tT < T:
        tT = max(sub_mult, (tT // sub_mult) * sub_mult)
    # Keep at least two grid steps so both v7x TensorCores get work.
    if B * _cdiv(T, tT) < 2 and T >= 2 * sub_mult:
        tT = _round_up(_cdiv(T, 2), sub_mult)
    return tT


# ----------------------------------------------------------------------------
# Wrapper
# ----------------------------------------------------------------------------
def rotary(x, base=10000.0):
    """Apply rotary embedding. x: (B, T, H, D), rotary dim == D (as in the
    PyTorch module, where broadcasting requires dim == head_dim)."""
    assert x.ndim == 4, "expected (B, T, H, D)"
    B, T, H, D = x.shape
    assert D % 2 == 0, "head_dim must be even for rotary embedding"

    ix = jnp.dtype(x.dtype).itemsize
    min_sub = _MIN_SUBLANE.get(ix, 8)
    padded_D = _round_up(D, 128)

    # f32 tables + f32 math regardless of activation dtype: the kernel is
    # HBM-bound and table bytes are a small fraction of x bytes.
    #   y[:, :d] = x1*cos + x2*sin ; y[:, d:] = x2*cos - x1*sin
    #   => y = x * [cos|cos] + roll(x, d) * [sin|-sin]
    inv_freq = 1.0 / (base ** (jnp.arange(0, D, 2, dtype=jnp.float32) / D))   # (d,)
    t = jnp.arange(T, dtype=jnp.float32)
    freqs = jnp.outer(t, inv_freq)                                            # (T, d)
    cos = jnp.cos(freqs)
    sin = jnp.sin(freqs)
    tab = jnp.concatenate([cos, cos, sin, -sin], axis=-1)                     # (T, 2*D) f32

    vmem_limit = _vmem_limit_bytes()
    cparams = pltpu.CompilerParams(
        dimension_semantics=("parallel", "parallel"),
        vmem_limit_bytes=vmem_limit,
    )

    if H % min_sub == 0:
        # --- sublane-aligned head count: keep the (tT, H, D) 3-D block -----
        x_bytes_per_t = H * padded_D * ix
        tab_bytes_per_t = 2 * padded_D * 4
        tT = _pick_seq_tile(T, B, x_bytes_per_t, tab_bytes_per_t, 8, vmem_limit)
        grid = (_cdiv(T, tT), B)          # batch innermost -> table DMA reused
        return pl.pallas_call(
            _rope_kernel_3d,
            out_shape=jax.ShapeDtypeStruct((B, T, H, D), x.dtype),
            grid_spec=pltpu.PrefetchScalarGridSpec(
                num_scalar_prefetch=0,
                grid=grid,
                in_specs=[
                    pl.BlockSpec((None, tT, H, D), lambda s, b: (b, s, 0, 0)),
                    pl.BlockSpec((tT, 2 * D), lambda s, b: (s, 0)),
                ],
                out_specs=pl.BlockSpec((None, tT, H, D), lambda s, b: (b, s, 0, 0)),
            ),
            compiler_params=cparams,
        )(x, tab)

    # --- small / unaligned head count: flatten (T, H) into rows ------------
    # Removes sublane padding (dense vregs, unmasked full-lane stores); the
    # table is pre-repeated per row (plain XLA outside the kernel) and, with
    # batch as the inner grid axis, fetched only once per sequence tile.
    x2 = x.reshape(B, T * H, D)
    tab_rep = jnp.repeat(tab, H, axis=0)                                      # (T*H, 2*D)
    sub_mult = max(8, min_sub)
    x_bytes_per_t = H * padded_D * ix
    tab_bytes_per_t = H * 2 * padded_D * 4
    tT = _pick_seq_tile(T, B, x_bytes_per_t, tab_bytes_per_t, sub_mult, vmem_limit)
    grid = (_cdiv(T, tT), B)
    rows = tT * H
    out = pl.pallas_call(
        _rope_kernel_2d,
        out_shape=jax.ShapeDtypeStruct((B, T * H, D), x.dtype),
        grid_spec=pltpu.PrefetchScalarGridSpec(
            num_scalar_prefetch=0,
            grid=grid,
            in_specs=[
                pl.BlockSpec((None, rows, D), lambda s, b: (b, s, 0)),
                pl.BlockSpec((rows, 2 * D), lambda s, b: (s, 0)),
            ],
            out_specs=pl.BlockSpec((None, rows, D), lambda s, b: (b, s, 0)),
        ),
        compiler_params=cparams,
    )(x2, tab_rep)
    return out.reshape(B, T, H, D)


# ----------------------------------------------------------------------------
# Pure-JAX reference mirroring the PyTorch forward (f32 math)
# ----------------------------------------------------------------------------
def rotary_ref(x, base=10000.0):
    B, T, H, D = x.shape
    inv_freq = 1.0 / (base ** (jnp.arange(0, D, 2, dtype=jnp.float32) / D))
    t = jnp.arange(T, dtype=jnp.float32)
    freqs = jnp.outer(t, inv_freq)
    cos = jnp.cos(freqs)[None, :, None, :]
    sin = jnp.sin(freqs)[None, :, None, :]
    d = D // 2
    x1 = x[..., :d].astype(jnp.float32)
    x2 = x[..., d:].astype(jnp.float32)
    y1 = x1 * cos + x2 * sin
    y2 = x1 * (-sin) + x2 * cos
    return jnp.concatenate([y1, y2], axis=3).astype(x.dtype)


if __name__ == "__main__":
    key = jax.random.PRNGKey(0)

    # Small shapes consistent with the GPT attention: realistic head_dim 128,
    # a couple of heads, short sequence, batch 2.  H=2 exercises the
    # flattened-row path; H=8 exercises the 3-D (aligned-heads) path.
    B, T, H, D = 2, 32, 2, 128
    x = jax.random.normal(key, (B, T, H, D), dtype=jnp.float32)

    # f32, flattened-row path — should match the reference essentially exactly.
    out = jax.block_until_ready(rotary(x))
    ref = rotary_ref(x)
    assert out.shape == x.shape and out.dtype == x.dtype
    assert jnp.allclose(out, ref, atol=1e-5, rtol=1e-5), "f32 mismatch vs reference"

    # bf16 activations, f32 tables/math in-kernel — only I/O rounding differs.
    xb = x.astype(jnp.bfloat16)
    outb = jax.block_until_ready(rotary(xb))
    refb = rotary_ref(xb)
    assert outb.shape == xb.shape and outb.dtype == xb.dtype
    assert jnp.allclose(outb.astype(jnp.float32), refb.astype(jnp.float32),
                        atol=2e-2, rtol=2e-2), "bf16 mismatch vs reference"

    # Sublane-aligned head count -> 3-D block path.
    x8 = jax.random.normal(jax.random.PRNGKey(1), (B, T, 8, D), dtype=jnp.float32)
    out8 = jax.block_until_ready(rotary(x8))
    ref8 = rotary_ref(x8)
    assert out8.shape == x8.shape and out8.dtype == x8.dtype
    assert jnp.allclose(out8, ref8, atol=1e-5, rtol=1e-5), "f32 (H=8) mismatch vs reference"

    print("KERNEL_OK")
</pallas_src>

<mosaic_0001>
module attributes {stable_mosaic.version = 11 : i64} {
  func.func @_rope_kernel_2d(%arg0: i32, %arg1: i32, %arg2: memref<1x64x128xf32, #tpu.memory_space<vmem>>, %arg3: memref<64x256xf32, #tpu.memory_space<vmem>>, %arg4: memref<1x64x128xf32, #tpu.memory_space<vmem>>) attributes {dimension_semantics = [#tpu.dimension_semantics<parallel>, #tpu.dimension_semantics<parallel>], iteration_bounds = array<i64: 1, 2>, scalar_prefetch = 0 : i64, scratch_operands = 0 : i64, tpu.core_type = #tpu.core_type<tc>, window_params = [{transform_indices = @transform_0, window_bounds = array<i64: 1, 64, 128>}, {transform_indices = @transform_1, window_bounds = array<i64: 64, 256>}, {transform_indices = @transform_2, window_bounds = array<i64: 1, 64, 128>}]} {
    %c0 = arith.constant 0 : index
    %c0_0 = arith.constant 0 : index
    %c0_1 = arith.constant 0 : index
    %0 = vector.load %arg2[%c0, %c0_0, %c0_1] : memref<1x64x128xf32, #tpu.memory_space<vmem>>, vector<1x64x128xf32>
    %1 = vector.shape_cast %0 : vector<1x64x128xf32> to vector<64x128xf32>
    %c64_i32 = arith.constant 64 : i32
    %2 = tpu.dynamic_rotate %1 by %c64_i32 dim 1 : vector<64x128xf32>, i32 -> vector<64x128xf32>
    %c0_2 = arith.constant 0 : index
    %c0_3 = arith.constant 0 : index
    %3 = vector.load %arg3[%c0_2, %c0_3] : memref<64x256xf32, #tpu.memory_space<vmem>>, vector<64x256xf32>
    %4 = vector.extract_strided_slice %3 {offsets = [0, 0], sizes = [64, 128], strides = [1, 1]} : vector<64x256xf32> to vector<64x128xf32>
    %5 = vector.extract_strided_slice %3 {offsets = [0, 128], sizes = [64, 128], strides = [1, 1]} : vector<64x256xf32> to vector<64x128xf32>
    %6 = arith.mulf %1, %4 : vector<64x128xf32>
    %7 = arith.mulf %2, %5 : vector<64x128xf32>
    %8 = arith.addf %6, %7 : vector<64x128xf32>
    %c0_4 = arith.constant 0 : index
    %c0_5 = arith.constant 0 : index
    %c0_6 = arith.constant 0 : index
    %9 = vector.load %arg4[%c0_4, %c0_5, %c0_6] : memref<1x64x128xf32, #tpu.memory_space<vmem>>, vector<1x64x128xf32>
    %10 = vector.shape_cast %9 : vector<1x64x128xf32> to vector<64x128xf32>
    %11 = vector.shape_cast %8 : vector<64x128xf32> to vector<1x64x128xf32>
    tpu.vector_store %arg4[%c0_4, %c0_5, %c0_6], %11 {strides = array<i32>} : memref<1x64x128xf32, #tpu.memory_space<vmem>>, vector<1x64x128xf32>,
    return
  }
  func.func @transform_0(%arg0: i32, %arg1: i32) -> (i32, i32, i32) {
    %c0_i32 = arith.constant 0 : i32
    %c0_i32_0 = arith.constant 0 : i32
    return %arg1, %arg0, %c0_i32 : i32, i32, i32
  }
  func.func @transform_1(%arg0: i32, %arg1: i32) -> (i32, i32) {
    %c0_i32 = arith.constant 0 : i32
    %c0_i32_0 = arith.constant 0 : i32
    return %arg0, %c0_i32 : i32, i32
  }
  func.func @transform_2(%arg0: i32, %arg1: i32) -> (i32, i32, i32) {
    %c0_i32 = arith.constant 0 : i32
    %c0_i32_0 = arith.constant 0 : i32
    return %arg1, %arg0, %c0_i32 : i32, i32, i32
  }
}

</mosaic_0001>

<llo_original>
// kernel: tpu_custom_call.1
$region0: #{tpu_custom_call.1}
  #allocation0 [shape = 'u32[]', space=smem, size = 0x4, offset = 0x4, fixed_abs, tag = 'smem constant byte address 0x4 - core index']
  #allocation1 [shape = 'u32[144,128]{1,0:T(1,128)}', space=vmem, size = 0x12000, scoped, tag = 'internal scratch']
  %s0 = inlined_call_operand.hbm [shape: f32[2,64,128], index: 0, kind: input, shape index: {}]
  %s1 = inlined_call_operand.hbm [shape: f32[64,256], index: 1, kind: input, shape index: {}]
  %s2 = inlined_call_operand.hbm [shape: f32[2,64,128], index: 2, kind: output, shape index: {}]
  %s3 = sld [smem:[#allocation0]]
  $region49: #{tpu_custom_call.1} parent=0
    _
  %s5 = ssub.s32 1, %s3
  %s6 = scalar_select 0, %s5, %s3
  $region1: #{tpu_custom_call.1} parent=0
    #allocation2 [shape = 'u8[65536]{0}', space=vmem, size = 0x10000, scoped, tag = 'input window, operand 0']
    #allocation3 [shape = 's32[2]{0}', space=sflag, size = 0x8, scoped, tag = 'scoped memory for tpu_custom_call.1']
    #allocation4 [shape = 's32[2]{0}', space=sflag, size = 0x8, scoped, tag = 'scoped memory for tpu_custom_call.1']
    #allocation5 [shape = 'u8[65536]{0}', space=vmem, size = 0x10000, scoped, tag = 'input window, operand 1, single buffered']
    #allocation6 [shape = 's32[1]{0}', space=sflag, size = 0x4, scoped, tag = 'scoped memory for tpu_custom_call.1']
    #allocation7 [shape = 'u8[65536]{0}', space=vmem, size = 0x10000, scoped, tag = 'output window, operand 0']
    %7 = vsyncpa [#allocation3], 0
    %s8 = scalar_lea.sflag [#allocation3], 1
    %9 = vsyncpa %s8, 0
    %10 = vsyncpa [#allocation6], 0
    %11 = vsyncpa [#allocation4], 0
    %s12 = scalar_lea.sflag [#allocation4], 1
    %13 = vsyncpa %s12, 0
    loop: start=0, step=1, limit=4
    $region2: #{tpu_custom_call.1} parent=1 // loop_pre_header
      _
    $region3: #{tpu_custom_call.1} parent=1 // loop_header
      %s15 = sphi 0, %s19
      %p16 = scmp.ge.s32.totalorder %s15, 4
      %s22 = sphi 0, %s34
      %s23 = sphi 0, %s30
      %s24 = sphi 0, %s22
      %s25 = sphi 0, %s23
      %s26 = sphi 0, %s24
      %s27 = sphi 0, %s25
      %s39 = sphi 0, %s41
      %s42 = sphi 0, %s39
      %s43 = sphi 0, %s42
      %s59 = sphi 0, %s43
      %s65 = sphi 0, %s67
      %s68 = sphi 0, %s65
      %s69 = sphi 0, %s68
      %s85 = sphi 0, %s69
      %s93 = sphi 0, %s95
      %s96 = sphi 0, %s93
      %s97 = sphi 0, %s96
      %s113 = sphi 0, %s97
    $region4: #{tpu_custom_call.1} parent=1 // loop_header_branch
      %18 = sbr.rel (%p16) target = $region8
    $region5: #{tpu_custom_call.1} parent=1 // loop_body
      %s20 = ssub.s32 %s15, 1
      %s21 = ssub.s32 %s15, 2
      %s28 = sadd.s32 1, %s23
      %p29 = scmp.ge.s32.totalorder %s28, 2
      %s30 = scalar_select %p29, 0, %s28
      %s31 = sadd.s32 1, %s22
      %s32 = scalar_select %p29, %s31, %s22
      %p33 = scmp.ge.s32.totalorder %s32, 1
      %s34 = scalar_select %p33, 0, %s32
      %s35 = ssub.s32 %s23, %s30
      %s36 = ssub.s32 %s22, %s34
      %s37 = sor.u32 %s35, %s36
      %p38 = scmp.eq.s32.totalorder %s37, 0
      %s40 = sadd.s32 %s39, 1
      %s41 = scalar_select %p38, %s39, %s40
      %p44 = pneg %p38
      %p45 = scmp.eq.s32.totalorder %s15, 1
      %p46 = por %p44, %p45
      %p47 = scmp.ne.s32.totalorder %s39, %s42
      %p48 = scmp.eq.s32.totalorder %s15, 0
      %p49 = por %p47, %p48
      %p50 = scmp.ne.s32.totalorder %s39, %s42
      %p51 = scmp.eq.s32.totalorder %s20, 1
      %p52 = por %p50, %p51
      %p53 = scmp.ne.s32.totalorder %s42, %s43
      %p54 = scmp.eq.s32.totalorder %s20, 0
      %p55 = por %p53, %p54
      %p56 = scmp.ne.s32.totalorder %s42, %s43
      %p57 = scmp.eq.s32.totalorder %s21, 1
      %p58 = por %p56, %p57
      %p60 = scmp.ne.s32.totalorder %s43, %s59
      %p61 = scmp.eq.s32.totalorder %s21, 0
      %p62 = por %p60, %p61
      %s63 = ssub.s32 %s22, %s34
      %p64 = scmp.eq.s32.totalorder %s63, 0
      %s66 = sadd.s32 %s65, 1
      %s67 = scalar_select %p64, %s65, %s66
      %p70 = pneg %p64
      %p71 = scmp.eq.s32.totalorder %s15, 1
      %p72 = por %p70, %p71
      %p73 = scmp.ne.s32.totalorder %s65, %s68
      %p74 = scmp.eq.s32.totalorder %s15, 0
      %p75 = por %p73, %p74
      %p76 = scmp.ne.s32.totalorder %s65, %s68
      %p77 = scmp.eq.s32.totalorder %s20, 1
      %p78 = por %p76, %p77
      %p79 = scmp.ne.s32.totalorder %s68, %s69
      %p80 = scmp.eq.s32.totalorder %s20, 0
      %p81 = por %p79, %p80
      %p82 = scmp.ne.s32.totalorder %s68, %s69
      %p83 = scmp.eq.s32.totalorder %s21, 1
      %p84 = por %p82, %p83
      %p86 = scmp.ne.s32.totalorder %s69, %s85
      %p87 = scmp.eq.s32.totalorder %s21, 0
      %p88 = por %p86, %p87
      %s89 = ssub.s32 %s23, %s30
      %s90 = ssub.s32 %s22, %s34
      %s91 = sor.u32 %s89, %s90
      %p92 = scmp.eq.s32.totalorder %s91, 0
      %s94 = sadd.s32 %s93, 1
      %s95 = scalar_select %p92, %s93, %s94
      %p98 = pneg %p92
      %p99 = scmp.eq.s32.totalorder %s15, 1
      %p100 = por %p98, %p99
      %p101 = scmp.ne.s32.totalorder %s93, %s96
      %p102 = scmp.eq.s32.totalorder %s15, 0
      %p103 = por %p101, %p102
      %p104 = scmp.ne.s32.totalorder %s93, %s96
      %p105 = scmp.eq.s32.totalorder %s20, 1
      %p106 = por %p104, %p105
      %p107 = scmp.ne.s32.totalorder %s96, %s97
      %p108 = scmp.eq.s32.totalorder %s20, 0
      %p109 = por %p107, %p108
      %p110 = scmp.ne.s32.totalorder %s96, %s97
      %p111 = scmp.eq.s32.totalorder %s21, 1
      %p112 = por %p110, %p111
      %p114 = scmp.ne.s32.totalorder %s97, %s113
      %p115 = scmp.eq.s32.totalorder %s21, 0
      %p116 = por %p114, %p115
      %p117 = scmp.le.s32.totalorder 1, %s15
      %p118 = scmp.lt.s32.totalorder %s15, 3
      %p119 = pnand %p117, %p118
      %p120 = pneg %p119
      // Predicated region
      $region9: #{tpu_custom_call.1} parent=5 // pred_check
        _
      $region10: #{tpu_custom_call.1} parent=5 // pred_check_branch
        %122 = sbr.rel (%p119) target = $region12
      $region11: #{tpu_custom_call.1} parent=5 // pred_region
        %s123 = ssub.s32 %s15, 1
        // Predicated region
        $region13: #{tpu_custom_call.1} parent=11 // pred_check
          %p124 = pneg %p81
        $region14: #{tpu_custom_call.1} parent=11 // pred_check_branch
          %126 = sbr.rel (%p124) target = $region16
        $region15: #{tpu_custom_call.1} parent=11 // pred_region
          %s127 = smul.u32 8, %s24
          %s129 = ssub.s32 2048, 2048
          %130 = vsyncadd [#allocation6], %s129
          %s131 = smul.addr %s127, 2
          %s132 = smul.addr %s131, 128
          %s133 = scalar_lea.hbm %s1, %s132
          %s134 = sshll.u32 [#allocation5], 4
          %s135 = int_to_ptr.vmem [resolvable:$true] %s134
          %140 = dma.hbm_to_vmem [thread:$0]  %s133, 2048, %s135, [#allocation6], 256, 256, 16
        $region16: #{tpu_custom_call.1} parent=11 // pred_fallthru
          _
      $region12: #{tpu_custom_call.1} parent=5 // pred_fallthru
        _
      %p141 = scmp.lt.s32.totalorder %s15, 2
      // Predicated region
      $region17: #{tpu_custom_call.1} parent=5 // pred_check
        %p142 = pneg %p141
      $region18: #{tpu_custom_call.1} parent=5 // pred_check_branch
        %144 = sbr.rel (%p142) target = $region20
      $region19: #{tpu_custom_call.1} parent=5 // pred_region
        // Predicated region
        $region21: #{tpu_custom_call.1} parent=19 // pred_check
          %p145 = pneg %p49
        $region22: #{tpu_custom_call.1} parent=19 // pred_check_branch
          %147 = sbr.rel (%p145) target = $region24
        $region23: #{tpu_custom_call.1} parent=19 // pred_region
          %s148 = sand.u32 %s39, 1
          %s149 = scalar_lea.sflag [#allocation3], %s148
          %s150 = sand.u32 %s39, 1
          %s151 = smul.addr %s150, 64
          %s152 = scalar_lea.vmem [#allocation2], %s151
          %s153 = smul.u32 8, %s22
          %s155 = ssub.s32 1024, 1024
          %156 = vsyncadd %s149, %s155
          %s157 = smul.addr %s23, 8
          %s158 = sadd.s32 %s153, %s157
          %s159 = smul.addr %s158, 128
          %s160 = scalar_lea.hbm %s0, %s159
          %s161 = sshll.u32 %s152, 4
          %s162 = int_to_ptr.vmem [resolvable:$true] %s161
          %167 = dma.hbm_to_vmem [thread:$0]  %s160, 1024, %s162, %s149, 128, 128, 8
        $region24: #{tpu_custom_call.1} parent=19 // pred_fallthru
          _
      $region20: #{tpu_custom_call.1} parent=5 // pred_fallthru
        _
      %p168 = scmp.le.s32.totalorder 1, %s15
      %p169 = scmp.lt.s32.totalorder %s15, 3
      %p170 = pnand %p168, %p169
      %p171 = pneg %p170
      // Predicated region
      $region25: #{tpu_custom_call.1} parent=5 // pred_check
        _
      $region26: #{tpu_custom_call.1} parent=5 // pred_check_branch
        %173 = sbr.rel (%p170) target = $region28
      $region27: #{tpu_custom_call.1} parent=5 // pred_region
        %s174 = ssub.s32 %s15, 1
        %s175 = sand.u32 %s42, 1
        %s176 = scalar_lea.sflag [#allocation3], %s175
        %s177 = sand.u32 %s42, 1
        %s178 = smul.addr %s177, 64
        %s179 = scalar_lea.vmem [#allocation2], %s178
        // Predicated region
        $region29: #{tpu_custom_call.1} parent=27 // pred_check
          %p180 = pneg %p55
        $region30: #{tpu_custom_call.1} parent=27 // pred_check_branch
          %182 = sbr.rel (%p180) target = $region32
        $region31: #{tpu_custom_call.1} parent=27 // pred_region
          %183 = dma.done %s176, 1024
        $region32: #{tpu_custom_call.1} parent=27 // pred_fallthru
          _
        // Predicated region
        $region33: #{tpu_custom_call.1} parent=27 // pred_check
          %p184 = pneg %p81
        $region34: #{tpu_custom_call.1} parent=27 // pred_check_branch
          %186 = sbr.rel (%p184) target = $region36
        $region35: #{tpu_custom_call.1} parent=27 // pred_region
          %187 = dma.done [#allocation6], 2048
        $region36: #{tpu_custom_call.1} parent=27 // pred_fallthru
          _
        %s188 = sand.u32 %s42, 1
        %s189 = scalar_lea.sflag [#allocation3], %s188
        %s190 = sand.u32 %s42, 1
        %s191 = smul.addr %s190, 64
        %s192 = scalar_lea.vmem [#allocation2], %s191
        %p193 = pneg %p55
        %p194 = pneg %p52
        %p195 = pneg %p81
        %p196 = pneg %p78
        %p197 = pneg %p109
        %p198 = pneg %p106
        %s199 = sand.u32 %s96, 1
        %s200 = scalar_lea.sflag [#allocation4], %s199
        %s201 = sand.u32 %s96, 1
        %s202 = smul.addr %s201, 64
        %s203 = scalar_lea.vmem [#allocation7], %s202
        %s204 = smul.u32 8, %s24
        %s205 = smul.u32 8, %s24
        %s206 = smul.u32 8, %s24
        %v207 = vld [vmem:[%s179] sm:$0xff]
        %v208 = vld [vmem:[%s179 + $0x8] sm:$0xff]
        %v209 = vld [vmem:[%s179 + $0x10] sm:$0xff]
        %v210 = vld [vmem:[%s179 + $0x18] sm:$0xff]
        %v211 = vld [vmem:[%s179 + $0x20] sm:$0xff]
        %v212 = vld [vmem:[%s179 + $0x28] sm:$0xff]
        %v213 = vld [vmem:[%s179 + $0x30] sm:$0xff]
        %v214 = vld [vmem:[%s179 + $0x38] sm:$0xff]
        %215 = vrot.lane.b32.xlu0 %v207, 64
        %v216 = vpop.permute.xlu0 %215
        %217 = vrot.lane.b32.xlu0 %v208, 64
        %v218 = vpop.permute.xlu0 %217
        %219 = vrot.lane.b32.xlu0 %v209, 64
        %v220 = vpop.permute.xlu0 %219
        %221 = vrot.lane.b32.xlu0 %v210, 64
        %v222 = vpop.permute.xlu0 %221
        %223 = vrot.lane.b32.xlu0 %v211, 64
        %v224 = vpop.permute.xlu0 %223
        %225 = vrot.lane.b32.xlu0 %v212, 64
        %v226 = vpop.permute.xlu0 %225
        %227 = vrot.lane.b32.xlu0 %v213, 64
        %v228 = vpop.permute.xlu0 %227
        %229 = vrot.lane.b32.xlu0 %v214, 64
        %v230 = vpop.permute.xlu0 %229
        %v231 = vld [vmem:[#allocation5] sm:$0xff]
        %v232 = vld [vmem:[#allocation5 + $0x8] sm:$0xff]
        %v233 = vld [vmem:[#allocation5 + $0x10] sm:$0xff]
        %v234 = vld [vmem:[#allocation5 + $0x18] sm:$0xff]
        %v235 = vld [vmem:[#allocation5 + $0x20] sm:$0xff]
        %v236 = vld [vmem:[#allocation5 + $0x28] sm:$0xff]
        %v237 = vld [vmem:[#allocation5 + $0x30] sm:$0xff]
        %v238 = vld [vmem:[#allocation5 + $0x38] sm:$0xff]
        %v239 = vld [vmem:[#allocation5 + $0x40] sm:$0xff]
        %v240 = vld [vmem:[#allocation5 + $0x48] sm:$0xff]
        %v241 = vld [vmem:[#allocation5 + $0x50] sm:$0xff]
        %v242 = vld [vmem:[#allocation5 + $0x58] sm:$0xff]
        %v243 = vld [vmem:[#allocation5 + $0x60] sm:$0xff]
        %v244 = vld [vmem:[#allocation5 + $0x68] sm:$0xff]
        %v245 = vld [vmem:[#allocation5 + $0x70] sm:$0xff]
        %v246 = vld [vmem:[#allocation5 + $0x78] sm:$0xff]
        %v247 = vmul.f32 %v207, %v231
        %v248 = vmul.f32 %v208, %v233
        %v249 = vmul.f32 %v209, %v235
        %v250 = vmul.f32 %v210, %v237
        %v251 = vmul.f32 %v211, %v239
        %v252 = vmul.f32 %v212, %v241
        %v253 = vmul.f32 %v213, %v243
        %v254 = vmul.f32 %v214, %v245
        %v255 = vmul.f32 %v216, %v232
        %v256 = vmul.f32 %v218, %v234
        %v257 = vmul.f32 %v220, %v236
        %v258 = vmul.f32 %v222, %v238
        %v259 = vmul.f32 %v224, %v240
        %v260 = vmul.f32 %v226, %v242
        %v261 = vmul.f32 %v228, %v244
        %v262 = vmul.f32 %v230, %v246
        %v263 = vadd.f32 %v247, %v255
        %v264 = vadd.f32 %v248, %v256
        %v265 = vadd.f32 %v249, %v257
        %v266 = vadd.f32 %v250, %v258
        %v267 = vadd.f32 %v251, %v259
        %v268 = vadd.f32 %v252, %v260
        %v269 = vadd.f32 %v253, %v261
        %v270 = vadd.f32 %v254, %v262
        %271 = vst [vmem:[%s203] sm:$0xff] %v263
        %272 = vst [vmem:[%s203 + $0x8] sm:$0xff] %v264
        %273 = vst [vmem:[%s203 + $0x10] sm:$0xff] %v265
        %274 = vst [vmem:[%s203 + $0x18] sm:$0xff] %v266
        %275 = vst [vmem:[%s203 + $0x20] sm:$0xff] %v267
        %276 = vst [vmem:[%s203 + $0x28] sm:$0xff] %v268
        %277 = vst [vmem:[%s203 + $0x30] sm:$0xff] %v269
        %278 = vst [vmem:[%s203 + $0x38] sm:$0xff] %v270
        %s279 = sand.u32 %s96, 1
        %s280 = scalar_lea.sflag [#allocation4], %s279
        %s281 = sand.u32 %s96, 1
        %s282 = smul.addr %s281, 64
        %s283 = scalar_lea.vmem [#allocation7], %s282
        // Predicated region
        $region37: #{tpu_custom_call.1} parent=27 // pred_check
          %p284 = pneg %p106
        $region38: #{tpu_custom_call.1} parent=27 // pred_check_branch
          %286 = sbr.rel (%p284) target = $region40
        $region39: #{tpu_custom_call.1} parent=27 // pred_region
          %s287 = smul.u32 8, %s24
          %s289 = ssub.s32 1024, 1024
          %290 = vsyncadd %s280, %s289
          %s291 = smul.addr %s25, 8
          %s292 = sadd.s32 %s287, %s291
          %s293 = smul.addr %s292, 128
          %s294 = scalar_lea.hbm %s2, %s293
          %s295 = sshll.u32 %s283, 4
          %s296 = int_to_ptr.vmem [resolvable:$true] %s295
          %301 = dma.vmem_to_hbm [thread:$0]  %s296, 1024, %s294, %s280, 128, 128, 8
        $region40: #{tpu_custom_call.1} parent=27 // pred_fallthru
          _
      $region28: #{tpu_custom_call.1} parent=5 // pred_fallthru
        _
      %p302 = scmp.le.s32.totalorder 2, %s15
      // Predicated region
      $region41: #{tpu_custom_call.1} parent=5 // pred_check
        %p303 = pneg %p302
      $region42: #{tpu_custom_call.1} parent=5 // pred_check_branch
        %305 = sbr.rel (%p303) target = $region44
      $region43: #{tpu_custom_call.1} parent=5 // pred_region
        %s306 = ssub.s32 %s15, 2
        // Predicated region
        $region45: #{tpu_custom_call.1} parent=43 // pred_check
          %p307 = pneg %p112
        $region46: #{tpu_custom_call.1} parent=43 // pred_check_branch
          %309 = sbr.rel (%p307) target = $region48
        $region47: #{tpu_custom_call.1} parent=43 // pred_region
          %s310 = sand.u32 %s97, 1
          %s311 = scalar_lea.sflag [#allocation4], %s310
          %s312 = sand.u32 %s97, 1
          %s313 = smul.addr %s312, 64
          %s314 = scalar_lea.vmem [#allocation7], %s313
          %315 = dma.done %s311, 1024
        $region48: #{tpu_custom_call.1} parent=43 // pred_fallthru
          _
      $region44: #{tpu_custom_call.1} parent=5 // pred_fallthru
        _
    $region6: #{tpu_custom_call.1} parent=1 // loop_footer
      %s19 = sadd.s32 1, %s15
    $region7: #{tpu_custom_call.1} parent=1 // loop_footer_branch
      %14 = sbr.rel target = $region3
    $region8: #{tpu_custom_call.1} parent=1 // loop_exit
      _
    %316 = vsyncpa [#allocation3], 1
    %s317 = scalar_lea.sflag [#allocation3], 1
    %318 = vsyncpa %s317, 1
    %319 = vsyncpa [#allocation6], 1
    %320 = vsyncpa [#allocation4], 1
    %s321 = scalar_lea.sflag [#allocation4], 1
    %322 = vsyncpa %s321, 1

</llo_original>
